<compile_context>
chip_gen: v6e
topology: v6e:2x2x1
jax: 0.10.0
libtpu: 0.0.40
codegen_flags: <defaults>
</compile_context>

<pallas_src>
import jax
import jax.numpy as jnp
from jax.experimental import pallas as pl
from jax.experimental.pallas import tpu as pltpu

FRAME_SIZE = 128   # samples per frame (T)
HIDDEN = 128       # frame-level encoder width (H)
EMB_DIM = 192      # speaker embedding dim (E), pyannote-style
EMB_PAD = 256      # lane-padded embedding dim used inside the kernel


def _round_up(x, m):
    return ((x + m - 1) // m) * m


def _vmem_budget_bytes():
    """Physical VMEM of the current generation (fallback: 64 MiB, v7x-safe)."""
    try:
        vmem = int(pltpu.get_tpu_info().vmem_capacity_bytes)
        if vmem >= (32 << 20):
            return vmem
    except Exception:
        pass
    return 64 << 20


def _pick_tiles(B, F, vmem_budget, frame_tile=None):
    """Batch tile (sublane-aligned) and frame tile (VMEM-bounded, mult. of 16)."""
    # Batch tile: >=2 grid steps along the parallel batch axis when B > 8
    # (dual TensorCore on v7x + restores input double-buffer overlap).
    if B <= 8:
        bt = 8
    else:
        bt = min(_round_up(-(-B // 2), 8), 64)

    # Frame tile: bound the per-step working set via the frame axis, never the
    # VMEM budget.  Per step ~ 2x bf16 x (double-buffered) + f32 h + f32 w*h
    # ~= 6 * x_bf16_bytes; keep that under ~50% of physical VMEM.
    x_byte_budget = max(int(vmem_budget * 0.5) // 6, 256 * 1024)
    x_byte_budget = min(x_byte_budget, 12 << 20)
    ft_cap = max((x_byte_budget // (bt * FRAME_SIZE * 2)) // 16 * 16, 16)
    if frame_tile is not None:
        ft_cap = min(ft_cap, max(_round_up(int(frame_tile), 16), 16))
    ft = min(_round_up(F, 16), ft_cap)
    return int(bt), int(ft)


def _embedding_kernel(x_ref, w_ref, we_ref, be_ref, wo_ref, bo_ref, o_ref,
                      mu_acc, ex2_acc):
    # x_ref:   (Bt, Ft, T)   framed waveform chunk (bf16)
    # w_ref:   (Bt, Ft, 1)   pre-normalized temporal weights chunk (f32)
    # we_ref:  (T, H)        encoder weight (bf16)
    # be_ref:  (1, H)        encoder bias (f32)
    # wo_ref:  (2H, E_pad)   fused [w_mu; w_sd] projection weight (bf16)
    # bo_ref:  (1, E_pad)    projection bias (f32)
    # o_ref:   (Bt, E_pad)   embeddings tile (f32), resident across the F axis
    # mu_acc:  (Bt, H)       running Sum_f wn*h        (f32 scratch)
    # ex2_acc: (Bt, H)       running Sum_f wn*h^2      (f32 scratch)
    f_idx = pl.program_id(1)

    @pl.when(f_idx == 0)
    def _():
        mu_acc[...] = jnp.zeros_like(mu_acc)
        ex2_acc[...] = jnp.zeros_like(ex2_acc)

    bt, ft, t = x_ref.shape
    h_dim = we_ref.shape[1]

    # ---- frame-level encoder: one (Bt*Ft, T) x (T, H) MXU matmul (bf16 in, f32 acc)
    x = x_ref[...].reshape(bt * ft, t)                        # free leading-dim merge (Ft % 16 == 0)
    h = jnp.dot(x, we_ref[...], preferred_element_type=jnp.float32)
    h = jnp.maximum(h + be_ref[...], 0.0)                     # bias + ReLU in f32 (VPU)
    h3 = h.reshape(bt, ft, h_dim)                             # (Bt, Ft, H)

    # ---- partial weighted statistics (weights already normalized on host)
    wn = w_ref[...]                                           # (Bt, Ft, 1) f32
    hw = h3 * wn                                              # (Bt, Ft, H)
    mu_acc[...] += jnp.sum(hw, axis=1)                        # Sum_f wn*h
    ex2_acc[...] += jnp.sum(hw * h3, axis=1)                  # Sum_f wn*h^2

    # ---- finalize: std + fused (Bt, 2H) x (2H, E_pad) projection, lane-dense store
    @pl.when(f_idx == pl.num_programs(1) - 1)
    def _():
        mu = mu_acc[...]
        ex2 = ex2_acc[...]
        sd = jnp.sqrt(jnp.maximum(ex2 - mu * mu, 1e-6))
        stats = jnp.concatenate([mu, sd], axis=-1).astype(jnp.bfloat16)   # (Bt, 2H)
        emb = jnp.dot(stats, wo_ref[...],
                      preferred_element_type=jnp.float32) + bo_ref[...]   # (Bt, E_pad)
        o_ref[...] = emb.astype(o_ref.dtype)


def init_params(key):
    k1, k2, k3, k4, k5 = jax.random.split(key, 5)
    scale_enc = 1.0 / jnp.sqrt(jnp.float32(FRAME_SIZE))
    scale_out = 1.0 / jnp.sqrt(jnp.float32(2 * HIDDEN))
    return {
        "w_enc": jax.random.normal(k1, (FRAME_SIZE, HIDDEN), jnp.float32) * scale_enc,
        "b_enc": jax.random.normal(k2, (1, HIDDEN), jnp.float32) * 0.01,
        "w_mu": jax.random.normal(k3, (HIDDEN, EMB_DIM), jnp.float32) * scale_out,
        "w_sd": jax.random.normal(k4, (HIDDEN, EMB_DIM), jnp.float32) * scale_out,
        "b_out": jax.random.normal(k5, (1, EMB_DIM), jnp.float32) * 0.01,
    }


def pyannote_embedding_forward(waveform, params, weights=None, frame_tile=None):
    """waveform: (B, C, S); weights: optional (B, F) -> speaker embeddings (B, EMB_DIM) f32."""
    B, C, S = waveform.shape
    F = S // FRAME_SIZE
    assert F >= 1, "waveform too short for one frame"

    vmem_budget = _vmem_budget_bytes()
    Bt, Ft = _pick_tiles(B, F, vmem_budget, frame_tile)
    B_pad = _round_up(B, Bt)
    F_pad = _round_up(F, Ft)

    # Glue (single fused producer): channel mean -> crop -> pad -> bf16 -> frame.
    # Padded frames / rows carry zero normalized weight, so real-row statistics
    # are unchanged.
    # TODO(synk): verify in HLO that mean + pad + cast + reshape fuse into one HBM pass.
    mono = jnp.mean(waveform.astype(jnp.float32), axis=1)[:, : F * FRAME_SIZE]   # (B, F*T)
    mono = jnp.pad(mono, ((0, B_pad - B), (0, (F_pad - F) * FRAME_SIZE)))
    x = mono.astype(jnp.bfloat16).reshape(B_pad, F_pad, FRAME_SIZE)              # (B_pad, F_pad, T) bf16

    if weights is None:
        weights = jnp.ones((B, F), jnp.float32)
    assert weights.shape == (B, F)
    w = weights.astype(jnp.float32)
    wn = w / (jnp.sum(w, axis=1, keepdims=True) + 1e-8)                # exact host-side normalization
    wn = jnp.pad(wn, ((0, B_pad - B), (0, F_pad - F))).reshape(B_pad, F_pad, 1)

    # Fused projection weight [w_mu; w_sd] -> (2H, E_pad), lane-padded to 256.
    w_enc = params["w_enc"].astype(jnp.bfloat16)
    b_enc = params["b_enc"].astype(jnp.float32)
    w_out = jnp.concatenate([params["w_mu"], params["w_sd"]], axis=0)            # (2H, E)
    w_out = jnp.pad(w_out, ((0, 0), (0, EMB_PAD - EMB_DIM))).astype(jnp.bfloat16)
    b_out = jnp.pad(params["b_out"].astype(jnp.float32),
                    ((0, 0), (0, EMB_PAD - EMB_DIM)))

    out = pl.pallas_call(
        _embedding_kernel,
        out_shape=jax.ShapeDtypeStruct((B_pad, EMB_PAD), jnp.float32),
        grid_spec=pltpu.PrefetchScalarGridSpec(
            num_scalar_prefetch=0,
            grid=(B_pad // Bt, F_pad // Ft),                                     # (parallel batch, arbitrary frames)
            in_specs=[
                pl.BlockSpec((Bt, Ft, FRAME_SIZE), lambda b, f: (b, f, 0)),      # framed waveform (bf16)
                pl.BlockSpec((Bt, Ft, 1), lambda b, f: (b, f, 0)),               # normalized weights (f32)
                pl.BlockSpec((FRAME_SIZE, HIDDEN), lambda b, f: (0, 0)),         # w_enc (bf16)
                pl.BlockSpec((1, HIDDEN), lambda b, f: (0, 0)),                  # b_enc
                pl.BlockSpec((2 * HIDDEN, EMB_PAD), lambda b, f: (0, 0)),        # fused w_out (bf16)
                pl.BlockSpec((1, EMB_PAD), lambda b, f: (0, 0)),                 # b_out
            ],
            out_specs=pl.BlockSpec((Bt, EMB_PAD), lambda b, f: (b, 0)),          # resident over F, lane-dense
            scratch_shapes=[
                pltpu.VMEM((Bt, HIDDEN), jnp.float32),                           # Sum wn*h
                pltpu.VMEM((Bt, HIDDEN), jnp.float32),                           # Sum wn*h^2
            ],
        ),
        compiler_params=pltpu.CompilerParams(
            dimension_semantics=("parallel", "arbitrary"),
            vmem_limit_bytes=int(vmem_budget * 0.8),
        ),
    )(x, wn, w_enc, b_enc, w_out, b_out)

    return out[:B, :EMB_DIM]


def _reference_forward(waveform, params, weights=None):
    """Pure-JAX f32 reference with identical forward semantics."""
    B, C, S = waveform.shape
    F = S // FRAME_SIZE
    mono = jnp.mean(waveform.astype(jnp.float32), axis=1)
    x = mono[:, : F * FRAME_SIZE].reshape(B, F, FRAME_SIZE)
    if weights is None:
        weights = jnp.ones((B, F), jnp.float32)
    h = jnp.maximum(jnp.einsum("bft,th->bfh", x, params["w_enc"]) + params["b_enc"], 0.0)
    w = weights.astype(jnp.float32)
    wn = w / (jnp.sum(w, axis=1, keepdims=True) + 1e-8)
    mu = jnp.einsum("bf,bfh->bh", wn, h)
    ex2 = jnp.einsum("bf,bfh->bh", wn, h * h)
    sd = jnp.sqrt(jnp.maximum(ex2 - mu * mu, 1e-6))
    return mu @ params["w_mu"] + sd @ params["w_sd"] + params["b_out"]


if __name__ == "__main__":
    key = jax.random.PRNGKey(0)
    k_wave, k_weights, k_params, k_wave2, k_weights2 = jax.random.split(key, 5)

    params = init_params(k_params)

    # --- small case matching the module signature: (batch, channels, samples)
    B, C, S = 2, 1, 2048
    F = S // FRAME_SIZE                                   # 16 frames
    waveform = jax.random.normal(k_wave, (B, C, S), jnp.float32)
    temporal_weights = jax.nn.sigmoid(
        jax.random.normal(k_weights, (B, F), jnp.float32))

    emb = pyannote_embedding_forward(waveform, params, temporal_weights)
    emb = jax.block_until_ready(emb)
    assert emb.shape == (B, EMB_DIM) and emb.dtype == jnp.float32
    ref = _reference_forward(waveform, params, temporal_weights)
    assert jnp.allclose(emb, ref, rtol=0.1, atol=0.1), float(jnp.max(jnp.abs(emb - ref)))

    # --- default (no weights) path, matching the PyTorch signature's weights=None
    emb_nw = pyannote_embedding_forward(waveform, params, None)
    emb_nw = jax.block_until_ready(emb_nw)
    assert emb_nw.shape == (B, EMB_DIM)
    ref_nw = _reference_forward(waveform, params, None)
    assert jnp.allclose(emb_nw, ref_nw, rtol=0.1, atol=0.1)

    # --- multi-step grid: 2 batch tiles x 3 frame tiles (exercises the
    #     frame-axis accumulators and accumulator re-init across batch tiles)
    B2, C2, S2 = 10, 2, FRAME_SIZE * 48
    F2 = S2 // FRAME_SIZE
    waveform2 = jax.random.normal(k_wave2, (B2, C2, S2), jnp.float32)
    temporal_weights2 = jax.nn.sigmoid(
        jax.random.normal(k_weights2, (B2, F2), jnp.float32))
    emb2 = pyannote_embedding_forward(waveform2, params, temporal_weights2, frame_tile=16)
    emb2 = jax.block_until_ready(emb2)
    assert emb2.shape == (B2, EMB_DIM)
    ref2 = _reference_forward(waveform2, params, temporal_weights2)
    assert jnp.allclose(emb2, ref2, rtol=0.1, atol=0.1), float(jnp.max(jnp.abs(emb2 - ref2)))

    print("KERNEL_OK")
</pallas_src>

<mosaic_0001>
module attributes {stable_mosaic.version = 11 : i64} {
  func.func @_embedding_kernel(%arg0: i32, %arg1: i32, %arg2: memref<8x16x128xbf16, #tpu.memory_space<vmem>>, %arg3: memref<8x16x1xf32, #tpu.memory_space<vmem>>, %arg4: memref<128x128xbf16, #tpu.memory_space<vmem>>, %arg5: memref<1x128xf32, #tpu.memory_space<vmem>>, %arg6: memref<256x256xbf16, #tpu.memory_space<vmem>>, %arg7: memref<1x256xf32, #tpu.memory_space<vmem>>, %arg8: memref<8x256xf32, #tpu.memory_space<vmem>>, %arg9: memref<8x128xf32, #tpu.memory_space<vmem>>, %arg10: memref<8x128xf32, #tpu.memory_space<vmem>>) attributes {dimension_semantics = [#tpu.dimension_semantics<parallel>, #tpu.dimension_semantics<arbitrary>], iteration_bounds = array<i64: 1, 1>, scalar_prefetch = 0 : i64, scratch_operands = 2 : i64, tpu.core_type = #tpu.core_type<tc>, window_params = [{transform_indices = @transform_0, window_bounds = array<i64: 8, 16, 128>}, {transform_indices = @transform_1, window_bounds = array<i64: 8, 16, 1>}, {pipeline_mode = #tpu.pipeline_mode<synchronous>, transform_indices = @transform_2, window_bounds = array<i64: 128, 128>}, {pipeline_mode = #tpu.pipeline_mode<synchronous>, transform_indices = @transform_3, window_bounds = array<i64: 1, 128>}, {pipeline_mode = #tpu.pipeline_mode<synchronous>, transform_indices = @transform_4, window_bounds = array<i64: 256, 256>}, {pipeline_mode = #tpu.pipeline_mode<synchronous>, transform_indices = @transform_5, window_bounds = array<i64: 1, 256>}, {transform_indices = @transform_6, window_bounds = array<i64: 8, 256>}]} {
    %c0_i32 = arith.constant 0 : i32
    %0 = arith.cmpi eq, %arg1, %c0_i32 : i32
    %1 = arith.extui %0 : i1 to i32
    %c0_i32_0 = arith.constant 0 : i32
    %2 = arith.cmpi ne, %1, %c0_i32_0 : i32
    scf.if %2 {
      %cst_23 = arith.constant 0.000000e+00 : f32
      %28 = vector.broadcast %cst_23 : f32 to vector<8x128xf32>
      %c0_24 = arith.constant 0 : index
      %c0_25 = arith.constant 0 : index
      %29 = vector.load %arg9[%c0_24, %c0_25] : memref<8x128xf32, #tpu.memory_space<vmem>>, vector<8x128xf32>
      tpu.vector_store %arg9[%c0_24, %c0_25], %28 {strides = array<i32>} : memref<8x128xf32, #tpu.memory_space<vmem>>, vector<8x128xf32>,
      %cst_26 = arith.constant 0.000000e+00 : f32
      %30 = vector.broadcast %cst_26 : f32 to vector<8x128xf32>
      %c0_27 = arith.constant 0 : index
      %c0_28 = arith.constant 0 : index
      %31 = vector.load %arg10[%c0_27, %c0_28] : memref<8x128xf32, #tpu.memory_space<vmem>>, vector<8x128xf32>
      tpu.vector_store %arg10[%c0_27, %c0_28], %30 {strides = array<i32>} : memref<8x128xf32, #tpu.memory_space<vmem>>, vector<8x128xf32>,
    } else {
    }
    %c0 = arith.constant 0 : index
    %c0_1 = arith.constant 0 : index
    %c0_2 = arith.constant 0 : index
    %3 = vector.load %arg2[%c0, %c0_1, %c0_2] : memref<8x16x128xbf16, #tpu.memory_space<vmem>>, vector<8x16x128xbf16>
    %4 = vector.shape_cast %3 : vector<8x16x128xbf16> to vector<128x128xbf16>
    %c0_3 = arith.constant 0 : index
    %c0_4 = arith.constant 0 : index
    %5 = vector.load %arg4[%c0_3, %c0_4] : memref<128x128xbf16, #tpu.memory_space<vmem>>, vector<128x128xbf16>
    %cst = arith.constant dense<0.000000e+00> : vector<128x128xf32>
    %6 = tpu.matmul %4, %5, %cst {dimension_numbers = #tpu.dot_dimension_numbers<[1], [0], [0], [1], [0, 0, 1, 1], [], []>} : vector<128x128xbf16>, vector<128x128xbf16>, vector<128x128xf32> -> vector<128x128xf32>
    %c0_5 = arith.constant 0 : index
    %c0_6 = arith.constant 0 : index
    %7 = vector.load %arg5[%c0_5, %c0_6] : memref<1x128xf32, #tpu.memory_space<vmem>>, vector<1x128xf32>
    %8 = vector.broadcast %7 : vector<1x128xf32> to vector<128x128xf32>
    %9 = arith.addf %6, %8 : vector<128x128xf32>
    %cst_7 = arith.constant 0.000000e+00 : f32
    %10 = vector.broadcast %cst_7 : f32 to vector<128x128xf32>
    %11 = arith.maximumf %9, %10 : vector<128x128xf32>
    %12 = vector.shape_cast %11 : vector<128x128xf32> to vector<8x16x128xf32>
    %c0_8 = arith.constant 0 : index
    %c0_9 = arith.constant 0 : index
    %c0_10 = arith.constant 0 : index
    %13 = vector.load %arg3[%c0_8, %c0_9, %c0_10] : memref<8x16x1xf32, #tpu.memory_space<vmem>>, vector<8x16x1xf32>
    %14 = vector.broadcast %13 : vector<8x16x1xf32> to vector<8x16x128xf32>
    %15 = arith.mulf %12, %14 : vector<8x16x128xf32>
    %c0_11 = arith.constant 0 : index
    %c0_12 = arith.constant 0 : index
    %16 = vector.load %arg9[%c0_11, %c0_12] : memref<8x128xf32, #tpu.memory_space<vmem>>, vector<8x128xf32>
    %cst_13 = arith.constant dense<0.000000e+00> : vector<8x128xf32>
    %17 = vector.multi_reduction <add>, %15, %cst_13 [1] : vector<8x16x128xf32> to vector<8x128xf32>
    %18 = arith.addf %16, %17 : vector<8x128xf32>
    %c0_14 = arith.constant 0 : index
    %c0_15 = arith.constant 0 : index
    %19 = vector.load %arg9[%c0_14, %c0_15] : memref<8x128xf32, #tpu.memory_space<vmem>>, vector<8x128xf32>
    tpu.vector_store %arg9[%c0_14, %c0_15], %18 {strides = array<i32>} : memref<8x128xf32, #tpu.memory_space<vmem>>, vector<8x128xf32>,
    %c0_16 = arith.constant 0 : index
    %c0_17 = arith.constant 0 : index
    %20 = vector.load %arg10[%c0_16, %c0_17] : memref<8x128xf32, #tpu.memory_space<vmem>>, vector<8x128xf32>
    %21 = arith.mulf %15, %12 : vector<8x16x128xf32>
    %cst_18 = arith.constant dense<0.000000e+00> : vector<8x128xf32>
    %22 = vector.multi_reduction <add>, %21, %cst_18 [1] : vector<8x16x128xf32> to vector<8x128xf32>
    %23 = arith.addf %20, %22 : vector<8x128xf32>
    %c0_19 = arith.constant 0 : index
    %c0_20 = arith.constant 0 : index
    %24 = vector.load %arg10[%c0_19, %c0_20] : memref<8x128xf32, #tpu.memory_space<vmem>>, vector<8x128xf32>
    tpu.vector_store %arg10[%c0_19, %c0_20], %23 {strides = array<i32>} : memref<8x128xf32, #tpu.memory_space<vmem>>, vector<8x128xf32>,
    %c0_i32_21 = arith.constant 0 : i32
    %25 = arith.cmpi eq, %arg1, %c0_i32_21 : i32
    %26 = arith.extui %25 : i1 to i32
    %c0_i32_22 = arith.constant 0 : i32
    %27 = arith.cmpi ne, %26, %c0_i32_22 : i32
    scf.if %27 {
      %c0_23 = arith.constant 0 : index
      %c0_24 = arith.constant 0 : index
      %28 = vector.load %arg9[%c0_23, %c0_24] : memref<8x128xf32, #tpu.memory_space<vmem>>, vector<8x128xf32>
      %c0_25 = arith.constant 0 : index
      %c0_26 = arith.constant 0 : index
      %29 = vector.load %arg10[%c0_25, %c0_26] : memref<8x128xf32, #tpu.memory_space<vmem>>, vector<8x128xf32>
      %30 = arith.mulf %28, %28 : vector<8x128xf32>
      %31 = arith.subf %29, %30 : vector<8x128xf32>
      %cst_27 = arith.constant 9.99999997E-7 : f32
      %32 = vector.broadcast %cst_27 : f32 to vector<8x128xf32>
      %33 = arith.maximumf %31, %32 : vector<8x128xf32>
      %34 = math.sqrt %33 : vector<8x128xf32>
      %35 = tpu.concatenate %28, %34 in 1 : vector<8x128xf32>, vector<8x128xf32> -> vector<8x256xf32>
      %36 = arith.truncf %35 : vector<8x256xf32> to vector<8x256xbf16>
      %c0_28 = arith.constant 0 : index
      %c0_29 = arith.constant 0 : index
      %37 = vector.load %arg6[%c0_28, %c0_29] : memref<256x256xbf16, #tpu.memory_space<vmem>>, vector<256x256xbf16>
      %cst_30 = arith.constant dense<0.000000e+00> : vector<8x256xf32>
      %38 = tpu.matmul %36, %37, %cst_30 {dimension_numbers = #tpu.dot_dimension_numbers<[1], [0], [0], [1], [0, 0, 1, 1], [], []>} : vector<8x256xbf16>, vector<256x256xbf16>, vector<8x256xf32> -> vector<8x256xf32>
      %c0_31 = arith.constant 0 : index
      %c0_32 = arith.constant 0 : index
      %39 = vector.load %arg7[%c0_31, %c0_32] : memref<1x256xf32, #tpu.memory_space<vmem>>, vector<1x256xf32>
      %40 = vector.broadcast %39 : vector<1x256xf32> to vector<8x256xf32>
      %41 = arith.addf %38, %40 : vector<8x256xf32>
      %c0_33 = arith.constant 0 : index
      %c0_34 = arith.constant 0 : index
      %42 = vector.load %arg8[%c0_33, %c0_34] : memref<8x256xf32, #tpu.memory_space<vmem>>, vector<8x256xf32>
      tpu.vector_store %arg8[%c0_33, %c0_34], %41 {strides = array<i32>} : memref<8x256xf32, #tpu.memory_space<vmem>>, vector<8x256xf32>,
    } else {
    }
    return
  }
  func.func @transform_0(%arg0: i32, %arg1: i32) -> (i32, i32, i32) {
    %c0_i32 = arith.constant 0 : i32
    %c0_i32_0 = arith.constant 0 : i32
    return %arg0, %arg1, %c0_i32 : i32, i32, i32
  }
  func.func @transform_1(%arg0: i32, %arg1: i32) -> (i32, i32, i32) {
    %c0_i32 = arith.constant 0 : i32
    %c0_i32_0 = arith.constant 0 : i32
    return %arg0, %arg1, %c0_i32 : i32, i32, i32
  }
  func.func @transform_2(%arg0: i32, %arg1: i32) -> (i32, i32) {
    %c0_i32 = arith.constant 0 : i32
    %c0_i32_0 = arith.constant 0 : i32
    %c0_i32_1 = arith.constant 0 : i32
    return %c0_i32, %c0_i32_0 : i32, i32
  }
  func.func @transform_3(%arg0: i32, %arg1: i32) -> (i32, i32) {
    %c0_i32 = arith.constant 0 : i32
    %c0_i32_0 = arith.constant 0 : i32
    %c0_i32_1 = arith.constant 0 : i32
    return %c0_i32, %c0_i32_0 : i32, i32
  }
  func.func @transform_4(%arg0: i32, %arg1: i32) -> (i32, i32) {
    %c0_i32 = arith.constant 0 : i32
    %c0_i32_0 = arith.constant 0 : i32
    %c0_i32_1 = arith.constant 0 : i32
    return %c0_i32, %c0_i32_0 : i32, i32
  }
  func.func @transform_5(%arg0: i32, %arg1: i32) -> (i32, i32) {
    %c0_i32 = arith.constant 0 : i32
    %c0_i32_0 = arith.constant 0 : i32
    %c0_i32_1 = arith.constant 0 : i32
    return %c0_i32, %c0_i32_0 : i32, i32
  }
  func.func @transform_6(%arg0: i32, %arg1: i32) -> (i32, i32) {
    %c0_i32 = arith.constant 0 : i32
    %c0_i32_0 = arith.constant 0 : i32
    return %arg0, %c0_i32 : i32, i32
  }
}

</mosaic_0001>

<llo_original>
// kernel: tpu_custom_call.1
$region0: #{tpu_custom_call.1}
  #allocation0 [shape = 'u32[]', space=smem, size = 0x4, offset = 0x4, fixed_abs, tag = 'smem constant byte address 0x4 - core index']
  #allocation1 [shape = 'u32[144,128]{1,0:T(1,128)}', space=vmem, size = 0x12000, scoped, tag = 'internal scratch']
  #allocation2 [shape = 'f32[8,128]{1,0:T(8,128)}', space=vmem, size = 0x1000, scoped, tag = 'scratch operand']
  #allocation3 [shape = 'f32[8,128]{1,0:T(8,128)}', space=vmem, size = 0x1000, scoped, tag = 'scratch operand']
  %s0 = inlined_call_operand.vmem [shape: bf16[8,16,128], index: 0, kind: input, shape index: {}]
  %s1 = inlined_call_operand.vmem [shape: f32[8,16,1], index: 1, kind: input, shape index: {}]
  %s2 = inlined_call_operand.vmem [shape: bf16[128,128], index: 2, kind: input, shape index: {}]
  %s3 = inlined_call_operand.vmem [shape: f32[1,128], index: 3, kind: input, shape index: {}]
  %s4 = inlined_call_operand.hbm [shape: bf16[256,256], index: 4, kind: input, shape index: {}]
  %s5 = inlined_call_operand.vmem [shape: f32[1,256], index: 5, kind: input, shape index: {}]
  %s6 = inlined_call_operand.hbm [shape: f32[8,256], index: 6, kind: output, shape index: {}]
  %s7 = sld [smem:[#allocation0]]
  $region46: #{tpu_custom_call.1} parent=0
    _
  %s9 = ssub.s32 1, %s7
  %s10 = scalar_select 0, %s9, %s7
  $region1: #{tpu_custom_call.1} parent=0
    #allocation4 [shape = 'u8[131072]{0}', space=vmem, size = 0x20000, scoped, tag = 'input window, operand 4, single buffered']
    #allocation5 [shape = 's32[1]{0}', space=sflag, size = 0x4, scoped, tag = 'scoped memory for tpu_custom_call.1']
    #allocation6 [shape = 's32[1]{0}', space=sflag, size = 0x4, scoped, tag = 'scoped memory for tpu_custom_call.1']
    #allocation7 [shape = 'u8[8192]{0}', space=vmem, size = 0x2000, scoped, tag = 'output window, operand 0, single buffered']
    %11 = vsyncpa [#allocation5], 0
    %12 = vsyncpa [#allocation6], 0
    // Predicated region
    $region2: #{tpu_custom_call.1} parent=1 // pred_check
      _
    $region3: #{tpu_custom_call.1} parent=1 // pred_check_branch
      %14 = sbr.rel (0) target = $region5
    $region4: #{tpu_custom_call.1} parent=1 // pred_region
      _
    $region5: #{tpu_custom_call.1} parent=1 // pred_fallthru
      _
    // Predicated region
    $region6: #{tpu_custom_call.1} parent=1 // pred_check
      _
    $region7: #{tpu_custom_call.1} parent=1 // pred_check_branch
      %16 = sbr.rel (0) target = $region9
    $region8: #{tpu_custom_call.1} parent=1 // pred_region
      _
    $region9: #{tpu_custom_call.1} parent=1 // pred_fallthru
      _
    // Predicated region
    $region10: #{tpu_custom_call.1} parent=1 // pred_check
      _
    $region11: #{tpu_custom_call.1} parent=1 // pred_check_branch
      %18 = sbr.rel (0) target = $region13
    $region12: #{tpu_custom_call.1} parent=1 // pred_region
      _
    $region13: #{tpu_custom_call.1} parent=1 // pred_fallthru
      _
    // Predicated region
    $region14: #{tpu_custom_call.1} parent=1 // pred_check
      _
    $region15: #{tpu_custom_call.1} parent=1 // pred_check_branch
      %20 = sbr.rel (0) target = $region17
    $region16: #{tpu_custom_call.1} parent=1 // pred_region
      _
    $region17: #{tpu_custom_call.1} parent=1 // pred_fallthru
      _
    // Predicated region
    $region18: #{tpu_custom_call.1} parent=1 // pred_check
      _
    $region19: #{tpu_custom_call.1} parent=1 // pred_check_branch
      %22 = sbr.rel (0) target = $region21
    $region20: #{tpu_custom_call.1} parent=1 // pred_region
      %s24 = ssub.s32 4096, 4096
      %25 = vsyncadd [#allocation5], %s24
      %s26 = sshll.u32 [#allocation4], 4
      %s27 = int_to_ptr.vmem [resolvable:$true] %s26
      %32 = dma.hbm_to_vmem [thread:$0]  %s4, 4096, %s27, [#allocation5], 128, 128, 8
    $region21: #{tpu_custom_call.1} parent=1 // pred_fallthru
      _
    // Predicated region
    $region22: #{tpu_custom_call.1} parent=1 // pred_check
      _
    $region23: #{tpu_custom_call.1} parent=1 // pred_check_branch
      %34 = sbr.rel (0) target = $region25
    $region24: #{tpu_custom_call.1} parent=1 // pred_region
      _
    $region25: #{tpu_custom_call.1} parent=1 // pred_fallthru
      _
    // Predicated region
    $region26: #{tpu_custom_call.1} parent=1 // pred_check
      _
    $region27: #{tpu_custom_call.1} parent=1 // pred_check_branch
      %36 = sbr.rel (0) target = $region29
    $region28: #{tpu_custom_call.1} parent=1 // pred_region
      %37 = dma.done [#allocation5], 4096
    $region29: #{tpu_custom_call.1} parent=1 // pred_fallthru
      _
    %p39 = scmp.eq.s32.totalorder 0, 0
    // Predicated region
    $region30: #{tpu_custom_call.1} parent=1 // pred_check
      %p40 = pneg %p39
    $region31: #{tpu_custom_call.1} parent=1 // pred_check_branch
      %42 = sbr.rel (%p40) target = $region33
    $region32: #{tpu_custom_call.1} parent=1 // pred_region
      %43 = vst [vmem:[#allocation2] sm:$0xff] 0.0
      %44 = vst [vmem:[#allocation3] sm:$0xff] 0.0
    $region33: #{tpu_custom_call.1} parent=1 // pred_fallthru
      _
    %v45 = vld [vmem:[%s0] sm:$0xf]
    %v46 = vld [vmem:[%s0 + $0x4] sm:$0xf]
    %v47 = vld [vmem:[%s0 + $0x8] sm:$0xf]
    %v48 = vld [vmem:[%s0 + $0xc] sm:$0xf]
    %v49 = vld [vmem:[%s0 + $0x10] sm:$0xf]
    %v50 = vld [vmem:[%s0 + $0x14] sm:$0xf]
    %v51 = vld [vmem:[%s0 + $0x18] sm:$0xf]
    %v52 = vld [vmem:[%s0 + $0x1c] sm:$0xf]
    %v53 = vld [vmem:[%s0 + $0x20] sm:$0xf]
    %v54 = vld [vmem:[%s0 + $0x24] sm:$0xf]
    %v55 = vld [vmem:[%s0 + $0x28] sm:$0xf]
    %v56 = vld [vmem:[%s0 + $0x2c] sm:$0xf]
    %v57 = vld [vmem:[%s0 + $0x30] sm:$0xf]
    %v58 = vld [vmem:[%s0 + $0x34] sm:$0xf]
    %v59 = vld [vmem:[%s0 + $0x38] sm:$0xf]
    %v60 = vld [vmem:[%s0 + $0x3c] sm:$0xf]
    %v61 = vld [vmem:[%s2] sm:$0xf]
    %v62 = vld [vmem:[%s2 + $0x4] sm:$0xf]
    %v63 = vld [vmem:[%s2 + $0x8] sm:$0xf]
    %v64 = vld [vmem:[%s2 + $0xc] sm:$0xf]
    %v65 = vld [vmem:[%s2 + $0x10] sm:$0xf]
    %v66 = vld [vmem:[%s2 + $0x14] sm:$0xf]
    %v67 = vld [vmem:[%s2 + $0x18] sm:$0xf]
    %v68 = vld [vmem:[%s2 + $0x1c] sm:$0xf]
    %v69 = vld [vmem:[%s2 + $0x20] sm:$0xf]
    %v70 = vld [vmem:[%s2 + $0x24] sm:$0xf]
    %v71 = vld [vmem:[%s2 + $0x28] sm:$0xf]
    %v72 = vld [vmem:[%s2 + $0x2c] sm:$0xf]
    %v73 = vld [vmem:[%s2 + $0x30] sm:$0xf]
    %v74 = vld [vmem:[%s2 + $0x34] sm:$0xf]
    %v75 = vld [vmem:[%s2 + $0x38] sm:$0xf]
    %v76 = vld [vmem:[%s2 + $0x3c] sm:$0xf]
    %v77 = vld [vmem:[%s3] sm:$0x1]
    %v79 = vlaneseq
    %v80 = vshrl.u32 %v79, 7
    %v81 = vsub.s32 0, %v80
    %v82 = vrot.slane %v77, %v81
    %v100 = vunpack.c.l.b16 %v45
    %v101 = vunpack.c.l.b16 %v46
    %v102 = vunpack.c.l.b16 %v47
    %v103 = vunpack.c.l.b16 %v48
    %v104 = vunpack.c.l.b16 %v49
    %v105 = vunpack.c.l.b16 %v50
    %v106 = vunpack.c.l.b16 %v51
    %v107 = vunpack.c.l.b16 %v52
    %v108 = vunpack.c.l.b16 %v53
    %v109 = vunpack.c.l.b16 %v54
    %v110 = vunpack.c.l.b16 %v55
    %v111 = vunpack.c.l.b16 %v56
    %v112 = vunpack.c.l.b16 %v57
    %v113 = vunpack.c.l.b16 %v58
    %v114 = vunpack.c.l.b16 %v59
    %v115 = vunpack.c.l.b16 %v60
    %v116 = vpack.c.b16 %v101, %v100
    %v117 = vpack.c.b16 %v103, %v102
    %v118 = vpack.c.b16 %v105, %v104
    %v119 = vpack.c.b16 %v107, %v106
    %v120 = vpack.c.b16 %v109, %v108
    %v121 = vpack.c.b16 %v111, %v110
    %v122 = vpack.c.b16 %v113, %v112
    %v123 = vpack.c.b16 %v115, %v114
    %v148 = vunpack.c.l.b16 %v61
    %v149 = vunpack.c.l.b16 %v62
    %v150 = vunpack.c.l.b16 %v63
    %v151 = vunpack.c.l.b16 %v64
    %v152 = vunpack.c.l.b16 %v65
    %v153 = vunpack.c.l.b16 %v66
    %v154 = vunpack.c.l.b16 %v67
    %v155 = vunpack.c.l.b16 %v68
    %v156 = vunpack.c.l.b16 %v69
    %v157 = vunpack.c.l.b16 %v70
    %v158 = vunpack.c.l.b16 %v71
    %v159 = vunpack.c.l.b16 %v72
    %v160 = vunpack.c.l.b16 %v73
    %v161 = vunpack.c.l.b16 %v74
    %v162 = vunpack.c.l.b16 %v75
    %v163 = vunpack.c.l.b16 %v76
    %v164 = vpack.c.b16 %v149, %v148
    %v165 = vpack.c.b16 %v151, %v150
    %v166 = vpack.c.b16 %v153, %v152
    %v167 = vpack.c.b16 %v155, %v154
    %v168 = vpack.c.b16 %v157, %v156
    %v169 = vpack.c.b16 %v159, %v158
    %v170 = vpack.c.b16 %v161, %v160
    %v171 = vpack.c.b16 %v163, %v162
    %180 = vmatprep.subr.bf16.mxu0 0
    %181 = vmatpush1.bf16.msra.mxu0 %v171
    %182 = vmatprep.subr.bf16.mxu0 0
    %183 = vmatpush1.bf16.msra.mxu0 %v170
    %184 = vmatprep.subr.bf16.mxu0 0
    %185 = vmatpush1.bf16.msra.mxu0 %v169
    %186 = vmatprep.subr.bf16.mxu0 0
    %187 = vmatpush1.bf16.msra.mxu0 %v168
    %188 = vmatprep.subr.bf16.mxu0 0
    %189 = vmatpush1.bf16.msra.mxu0 %v167
    %190 = vmatprep.subr.bf16.mxu0 0
    %191 = vmatpush1.bf16.msra.mxu0 %v166
    %192 = vmatprep.subr.bf16.mxu0 0
    %193 = vmatpush1.bf16.msra.mxu0 %v165
    %194 = vmatprep.subr.bf16.mxu0 0
    %195 = vmatpush1.bf16.msra.mxu0 %v164
    %196 = vmatprep.subr.bf16.mxu0 0
    %197 = vmatpush2.bf16.msra.mxu0 0
    %198 = vmatprep.subr.bf16.mxu0 0
    %199 = vmatpush2.bf16.msra.mxu0 0
    %200 = vmatprep.subr.bf16.mxu0 0
    %201 = vmatpush2.bf16.msra.mxu0 0
    %202 = vmatprep.subr.bf16.mxu0 0
    %203 = vmatpush2.bf16.msra.mxu0 0
    %204 = vmatprep.subr.bf16.mxu0 0
    %205 = vmatpush2.bf16.msra.mxu0 0
    %206 = vmatprep.subr.bf16.mxu0 0
    %207 = vmatpush2.bf16.msra.mxu0 0
    %208 = vmatprep.subr.bf16.mxu0 0
    %209 = vmatpush2.bf16.msra.mxu0 0
    %210 = vmatprep.subr.bf16.mxu0 0
    %211 = vmatpush2.bf16.msra.mxu0 0
    %212 = vmatprep.mubr.bf16.mxu0 0
    %213 = vmatmul.mubr.bf16.gmra.mxu0 %v116
    %v214 = vpop.f32.mrf.mxu0
    %v215 = vadd.f32 %v82, %v214
    %v216 = vpop.f32.mrf.mxu0
    %v217 = vpop.f32.mrf.mxu0
    %v218 = vadd.f32 %v82, %v217
    %v219 = vpop.f32.mrf.mxu0
    %220 = vmatprep.mubr.bf16.mxu0 0
    %221 = vmatmul.mubr.bf16.gmra.mxu0 %v117
    %v222 = vpop.f32.mrf.mxu0
    %v223 = vadd.f32 %v82, %v222
    %v224 = vpop.f32.mrf.mxu0
    %v225 = vpop.f32.mrf.mxu0
    %v226 = vadd.f32 %v82, %v225
    %v227 = vpop.f32.mrf.mxu0
    %228 = vmatprep.mubr.bf16.mxu0 0
    %229 = vmatmul.mubr.bf16.gmra.mxu0 %v118
    %v230 = vpop.f32.mrf.mxu0
    %v231 = vadd.f32 %v82, %v230
    %v232 = vpop.f32.mrf.mxu0
    %v233 = vpop.f32.mrf.mxu0
    %v234 = vadd.f32 %v82, %v233
    %v235 = vpop.f32.mrf.mxu0
    %236 = vmatprep.mubr.bf16.mxu0 0
    %237 = vmatmul.mubr.bf16.gmra.mxu0 %v119
    %v238 = vpop.f32.mrf.mxu0
    %v239 = vadd.f32 %v82, %v238
    %v240 = vpop.f32.mrf.mxu0
    %v241 = vpop.f32.mrf.mxu0
    %v242 = vadd.f32 %v82, %v241
    %v243 = vpop.f32.mrf.mxu0
    %244 = vmatprep.mubr.bf16.mxu0 0
    %245 = vmatmul.mubr.bf16.gmra.mxu0 %v120
    %v246 = vpop.f32.mrf.mxu0
    %v247 = vadd.f32 %v82, %v246
    %v248 = vpop.f32.mrf.mxu0
    %v249 = vpop.f32.mrf.mxu0
    %v250 = vadd.f32 %v82, %v249
    %v251 = vpop.f32.mrf.mxu0
    %252 = vmatprep.mubr.bf16.mxu0 0
    %253 = vmatmul.mubr.bf16.gmra.mxu0 %v121
    %v254 = vpop.f32.mrf.mxu0
    %v255 = vadd.f32 %v82, %v254
    %v256 = vpop.f32.mrf.mxu0
    %v257 = vpop.f32.mrf.mxu0
    %v258 = vadd.f32 %v82, %v257
    %v259 = vpop.f32.mrf.mxu0
    %260 = vmatprep.mubr.bf16.mxu0 0
    %261 = vmatmul.mubr.bf16.gmra.mxu0 %v122
    %v262 = vpop.f32.mrf.mxu0
    %v263 = vadd.f32 %v82, %v262
    %v264 = vpop.f32.mrf.mxu0
    %v265 = vpop.f32.mrf.mxu0
    %v266 = vadd.f32 %v82, %v265
    %v267 = vpop.f32.mrf.mxu0
    %268 = vmatprep.mubr.bf16.mxu0 0
    %269 = vmatmul.mubr.bf16.gmra.mxu0 %v123
    %v270 = vpop.f32.mrf.mxu0
    %v271 = vadd.f32 %v82, %v270
    %v272 = vpop.f32.mrf.mxu0
    %v273 = vpop.f32.mrf.mxu0
    %v274 = vadd.f32 %v82, %v273
    %v275 = vpop.f32.mrf.mxu0
    %276 = vdwg.mxu0
    %v277 = vmax.f32 %v215, 0.0
    %v278 = vmax.f32 %v218, 0.0
    %v279 = vmax.f32 %v223, 0.0
    %v280 = vmax.f32 %v226, 0.0
    %v281 = vmax.f32 %v231, 0.0
    %v282 = vmax.f32 %v234, 0.0
    %v283 = vmax.f32 %v239, 0.0
    %v284 = vmax.f32 %v242, 0.0
    %v285 = vmax.f32 %v247, 0.0
    %v286 = vmax.f32 %v250, 0.0
    %v287 = vmax.f32 %v255, 0.0
    %v288 = vmax.f32 %v258, 0.0
    %v289 = vmax.f32 %v263, 0.0
    %v290 = vmax.f32 %v266, 0.0
    %v291 = vmax.f32 %v271, 0.0
    %v292 = vmax.f32 %v274, 0.0
    %v293 = vld [vmem:[%s1] sm:$0xff]
    %v294 = vld [vmem:[%s1 + $0x8] sm:$0xff]
    %v295 = vld [vmem:[%s1 + $0x10] sm:$0xff]
    %v296 = vld [vmem:[%s1 + $0x18] sm:$0xff]
    %v297 = vld [vmem:[%s1 + $0x20] sm:$0xff]
    %v298 = vld [vmem:[%s1 + $0x28] sm:$0xff]
    %v299 = vld [vmem:[%s1 + $0x30] sm:$0xff]
    %v300 = vld [vmem:[%s1 + $0x38] sm:$0xff]
    %v301 = vld [vmem:[%s1 + $0x40] sm:$0xff]
    %v302 = vld [vmem:[%s1 + $0x48] sm:$0xff]
    %v303 = vld [vmem:[%s1 + $0x50] sm:$0xff]
    %v304 = vld [vmem:[%s1 + $0x58] sm:$0xff]
    %v305 = vld [vmem:[%s1 + $0x60] sm:$0xff]
    %v306 = vld [vmem:[%s1 + $0x68] sm:$0xff]
    %v307 = vld [vmem:[%s1 + $0x70] sm:$0xff]
    %v308 = vld [vmem:[%s1 + $0x78] sm:$0xff]
    %310 = vset.pattern.permute.xlu0 0
    %311 = vperm.xlu0 %310, %v293
    %v312 = vpop.permute.xlu0 %311
    %315 = vset.pattern.permute.xlu0 0
    %316 = vperm.xlu0 %315, %v294
    %v317 = vpop.permute.xlu0 %316
    %320 = vset.pattern.permute.xlu0 0
    %321 = vperm.xlu0 %320, %v295
    %v322 = vpop.permute.xlu0 %321
    %325 = vset.pattern.permute.xlu0 0
    %326 = vperm.xlu0 %325, %v296
    %v327 = vpop.permute.xlu0 %326
    %330 = vset.pattern.permute.xlu0 0
    %331 = vperm.xlu0 %330, %v297
    %v332 = vpop.permute.xlu0 %331
    %335 = vset.pattern.permute.xlu0 0
    %336 = vperm.xlu0 %335, %v298
    %v337 = vpop.permute.xlu0 %336
    %340 = vset.pattern.permute.xlu0 0
    %341 = vperm.xlu0 %340, %v299
    %v342 = vpop.permute.xlu0 %341
    %345 = vset.pattern.permute.xlu0 0
    %346 = vperm.xlu0 %345, %v300
    %v347 = vpop.permute.xlu0 %346
    %350 = vset.pattern.permute.xlu0 0
    %351 = vperm.xlu0 %350, %v301
    %v352 = vpop.permute.xlu0 %351
    %355 = vset.pattern.permute.xlu0 0
    %356 = vperm.xlu0 %355, %v302
    %v357 = vpop.permute.xlu0 %356
    %360 = vset.pattern.permute.xlu0 0
    %361 = vperm.xlu0 %360, %v303
    %v362 = vpop.permute.xlu0 %361
    %365 = vset.pattern.permute.xlu0 0
    %366 = vperm.xlu0 %365, %v304
    %v367 = vpop.permute.xlu0 %366
    %370 = vset.pattern.permute.xlu0 0
    %371 = vperm.xlu0 %370, %v305
    %v372 = vpop.permute.xlu0 %371
    %375 = vset.pattern.permute.xlu0 0
    %376 = vperm.xlu0 %375, %v306
    %v377 = vpop.permute.xlu0 %376
    %380 = vset.pattern.permute.xlu0 0
    %381 = vperm.xlu0 %380, %v307
    %v382 = vpop.permute.xlu0 %381
    %385 = vset.pattern.permute.xlu0 0
    %386 = vperm.xlu0 %385, %v308
    %v387 = vpop.permute.xlu0 %386
    %v389 = vmul.f32 %v277, %v312
    %v390 = vmul.f32 %v278, %v317
    %v391 = vmul.f32 %v279, %v322
    %v392 = vmul.f32 %v280, %v327
    %v393 = vmul.f32 %v281, %v332
    %v394 = vmul.f32 %v282, %v337
    %v395 = vmul.f32 %v283, %v342
    %v396 = vmul.f32 %v284, %v347
    %v397 = vmul.f32 %v285, %v352
    %v398 = vmul.f32 %v286, %v357
    %v399 = vmul.f32 %v287, %v362
    %v400 = vmul.f32 %v288, %v367
    %v401 = vmul.f32 %v289, %v372
    %v402 = vmul.f32 %v290, %v377
    %v403 = vmul.f32 %v291, %v382
    %v404 = vmul.f32 %v292, %v387
    %v405 = vld [vmem:[#allocation2] sm:$0xff]
    %v406 = vadd.f32 %v389, %v390
    %v407 = vrot.slane %v406, 4
    %v408 = vadd.f32 %v406, %v407
    %v409 = vrot.slane %v408, 2
    %v410 = vadd.f32 %v408, %v409
    %v411 = vrot.slane %v410, 1
    %v412 = vadd.f32 %v410, %v411
    %v413 = vadd.f32 %v391, %v392
    %v414 = vrot.slane %v413, 4
    %v415 = vadd.f32 %v413, %v414
    %v416 = vrot.slane %v415, 2
    %v417 = vadd.f32 %v415, %v416
    %v418 = vrot.slane %v417, 1
    %v419 = vadd.f32 %v417, %v418
    %v420 = vadd.f32 %v393, %v394
    %v421 = vrot.slane %v420, 4
    %v422 = vadd.f32 %v420, %v421
    %v423 = vrot.slane %v422, 2
    %v424 = vadd.f32 %v422, %v423
    %v425 = vrot.slane %v424, 1
    %v426 = vadd.f32 %v424, %v425
    %v427 = vadd.f32 %v395, %v396
    %v428 = vrot.slane %v427, 4
    %v429 = vadd.f32 %v427, %v428
    %v430 = vrot.slane %v429, 2
    %v431 = vadd.f32 %v429, %v430
    %v432 = vrot.slane %v431, 1
    %v433 = vadd.f32 %v431, %v432
    %v434 = vadd.f32 %v397, %v398
    %v435 = vrot.slane %v434, 4
    %v436 = vadd.f32 %v434, %v435
    %v437 = vrot.slane %v436, 2
    %v438 = vadd.f32 %v436, %v437
    %v439 = vrot.slane %v438, 1
    %v440 = vadd.f32 %v438, %v439
    %v441 = vadd.f32 %v399, %v400
    %v442 = vrot.slane %v441, 4
    %v443 = vadd.f32 %v441, %v442
    %v444 = vrot.slane %v443, 2
    %v445 = vadd.f32 %v443, %v444
    %v446 = vrot.slane %v445, 1
    %v447 = vadd.f32 %v445, %v446
    %v448 = vadd.f32 %v401, %v402
    %v449 = vrot.slane %v448, 4
    %v450 = vadd.f32 %v448, %v449
    %v451 = vrot.slane %v450, 2
    %v452 = vadd.f32 %v450, %v451
    %v453 = vrot.slane %v452, 1
    %v454 = vadd.f32 %v452, %v453
    %v455 = vadd.f32 %v403, %v404
    %v456 = vrot.slane %v455, 4
    %v457 = vadd.f32 %v455, %v456
    %v458 = vrot.slane %v457, 2
    %v459 = vadd.f32 %v457, %v458
    %v460 = vrot.slane %v459, 1
    %v461 = vadd.f32 %v459, %v460
    %vm470 = vcmask 1041409
    %v471 = vsel %vm470, %v419, %v412
    %vm472 = vcmask 1042434
    %v473 = vsel %vm472, %v426, %v471
    %vm474 = vcmask 1043459
    %v475 = vsel %vm474, %v433, %v473
    %vm476 = vcmask 1044484
    %v477 = vsel %vm476, %v440, %v475
    %vm478 = vcmask 1045509
    %v479 = vsel %vm478, %v447, %v477
    %vm480 = vcmask 1046534
    %v481 = vsel %vm480, %v454, %v479
    %vm482 = vcmask 1047559
    %v483 = vsel %vm482, %v461, %v481
    %v485 = vadd.f32 %v405, %v483
    %486 = vst [vmem:[#allocation2] sm:$0xff] %v485
    %v487 = vld [vmem:[#allocation3] sm:$0xff]
    %v488 = vmul.f32 %v389, %v277
    %v489 = vmul.f32 %v390, %v278
    %v490 = vmul.f32 %v391, %v279
    %v491 = vmul.f32 %v392, %v280
    %v492 = vmul.f32 %v393, %v281
    %v493 = vmul.f32 %v394, %v282
    %v494 = vmul.f32 %v395, %v283
    %v495 = vmul.f32 %v396, %v284
    %v496 = vmul.f32 %v397, %v285
    %v497 = vmul.f32 %v398, %v286
    %v498 = vmul.f32 %v399, %v287
    %v499 = vmul.f32 %v400, %v288
    %v500 = vmul.f32 %v401, %v289
    %v501 = vmul.f32 %v402, %v290
    %v502 = vmul.f32 %v403, %v291
    %v503 = vmul.f32 %v404, %v292
    %v504 = vadd.f32 %v488, %v489
    %v505 = vrot.slane %v504, 4
    %v506 = vadd.f32 %v504, %v505
    %v507 = vrot.slane %v506, 2
    %v508 = vadd.f32 %v506, %v507
    %v509 = vrot.slane %v508, 1
    %v510 = vadd.f32 %v508, %v509
    %v511 = vadd.f32 %v490, %v491
    %v512 = vrot.slane %v511, 4
    %v513 = vadd.f32 %v511, %v512
    %v514 = vrot.slane %v513, 2
    %v515 = vadd.f32 %v513, %v514
    %v516 = vrot.slane %v515, 1
    %v517 = vadd.f32 %v515, %v516
    %v518 = vadd.f32 %v492, %v493
    %v519 = vrot.slane %v518, 4
    %v520 = vadd.f32 %v518, %v519
    %v521 = vrot.slane %v520, 2
    %v522 = vadd.f32 %v520, %v521
    %v523 = vrot.slane %v522, 1
    %v524 = vadd.f32 %v522, %v523
    %v525 = vadd.f32 %v494, %v495
    %v526 = vrot.slane %v525, 4
    %v527 = vadd.f32 %v525, %v526
    %v528 = vrot.slane %v527, 2
    %v529 = vadd.f32 %v527, %v528
    %v530 = vrot.slane %v529, 1
    %v531 = vadd.f32 %v529, %v530
    %v532 = vadd.f32 %v496, %v497
    %v533 = vrot.slane %v532, 4
    %v534 = vadd.f32 %v532, %v533
    %v535 = vrot.slane %v534, 2
    %v536 = vadd.f32 %v534, %v535
    %v537 = vrot.slane %v536, 1
    %v538 = vadd.f32 %v536, %v537
    %v539 = vadd.f32 %v498, %v499
    %v540 = vrot.slane %v539, 4
    %v541 = vadd.f32 %v539, %v540
    %v542 = vrot.slane %v541, 2
    %v543 = vadd.f32 %v541, %v542
    %v544 = vrot.slane %v543, 1
    %v545 = vadd.f32 %v543, %v544
    %v546 = vadd.f32 %v500, %v501
    %v547 = vrot.slane %v546, 4
    %v548 = vadd.f32 %v546, %v547
    %v549 = vrot.slane %v548, 2
    %v550 = vadd.f32 %v548, %v549
    %v551 = vrot.slane %v550, 1
    %v552 = vadd.f32 %v550, %v551
    %v553 = vadd.f32 %v502, %v503
    %v554 = vrot.slane %v553, 4
    %v555 = vadd.f32 %v553, %v554
    %v556 = vrot.slane %v555, 2
    %v557 = vadd.f32 %v555, %v556
    %v558 = vrot.slane %v557, 1
    %v559 = vadd.f32 %v557, %v558
    %v568 = vsel %vm470, %v517, %v510
    %v569 = vsel %vm472, %v524, %v568
    %v570 = vsel %vm474, %v531, %v569
    %v571 = vsel %vm476, %v538, %v570
    %v572 = vsel %vm478, %v545, %v571
    %v573 = vsel %vm480, %v552, %v572
    %v574 = vsel %vm482, %v559, %v573
    %v576 = vadd.f32 %v487, %v574
    %577 = vst [vmem:[#allocation3] sm:$0xff] %v576
    // Predicated region
    $region34: #{tpu_custom_call.1} parent=1 // pred_check
      %p578 = pneg %p39
    $region35: #{tpu_custom_call.1} parent=1 // pred_check_branch
      %580 = sbr.rel (%p578) target = $region37
    $region36: #{tpu_custom_call.1} parent=1 // pred_region
      %v581 = vld [vmem:[#allocation2] sm:$0xff]
      %v582 = vld [vmem:[#allocation3] sm:$0xff]
      %v583 = vmul.f32 %v581, %v581
      %v584 = vsub.f32 %v582, %v583
      %v585 = vmax.f32 %v584, 1e-06
      %v586 = vrsqrt.pop %v585
      %v587 = vmul.f32 %v585, %v586
      %vm588 = vcmp.eq.f32.partialorder %v585, inf
      %v589 = vsel %vm588, %v585, %v587
      %vm590 = vcmp.eq.f32.partialorder %v585, 0.0
      %v591 = vand.u32 %v585, 2147483648
      %v592 = vsel %vm590, %v591, %v589
      %v593 = vpack.c.bf16 %v581, %v581
      %v594 = vpack.c.bf16 %v592, %v592
      %v595 = vld [vmem:[#allocation4] sm:$0xff]
      %v596 = vld [vmem:[#allocation4 + $0x8] sm:$0xff]
      %v597 = vld [vmem:[#allocation4 + $0x10] sm:$0xff]
      %v598 = vld [vmem:[#allocation4 + $0x18] sm:$0xff]
      %v599 = vld [vmem:[#allocation4 + $0x20] sm:$0xff]
      %v600 = vld [vmem:[#allocation4 + $0x28] sm:$0xff]
      %v601 = vld [vmem:[#allocation4 + $0x30] sm:$0xff]
      %v602 = vld [vmem:[#allocation4 + $0x38] sm:$0xff]
      %v603 = vld [vmem:[#allocation4 + $0x40] sm:$0xff]
      %v604 = vld [vmem:[#allocation4 + $0x48] sm:$0xff]
      %v605 = vld [vmem:[#allocation4 + $0x50] sm:$0xff]
      %v606 = vld [vmem:[#allocation4 + $0x58] sm:$0xff]
      %v607 = vld [vmem:[#allocation4 + $0x60] sm:$0xff]
      %v608 = vld [vmem:[#allocation4 + $0x68] sm:$0xff]
      %v609 = vld [vmem:[#allocation4 + $0x70] sm:$0xff]
      %v610 = vld [vmem:[#allocation4 + $0x78] sm:$0xff]
      %v611 = vld [vmem:[#allocation4 + $0x80] sm:$0xff]
      %v612 = vld [vmem:[#allocation4 + $0x88] sm:$0xff]
      %v613 = vld [vmem:[#allocation4 + $0x90] sm:$0xff]
      %v614 = vld [vmem:[#allocation4 + $0x98] sm:$0xff]
      %v615 = vld [vmem:[#allocation4 + $0xa0] sm:$0xff]
      %v616 = vld [vmem:[#allocation4 + $0xa8] sm:$0xff]
      %v617 = vld [vmem:[#allocation4 + $0xb0] sm:$0xff]
      %v618 = vld [vmem:[#allocation4 + $0xb8] sm:$0xff]
      %v619 = vld [vmem:[#allocation4 + $0xc0] sm:$0xff]
      %v620 = vld [vmem:[#allocation4 + $0xc8] sm:$0xff]
      %v621 = vld [vmem:[#allocation4 + $0xd0] sm:$0xff]
      %v622 = vld [vmem:[#allocation4 + $0xd8] sm:$0xff]
      %v623 = vld [vmem:[#allocation4 + $0xe0] sm:$0xff]
      %v624 = vld [vmem:[#allocation4 + $0xe8] sm:$0xff]
      %v625 = vld [vmem:[#allocation4 + $0xf0] sm:$0xff]
      %v626 = vld [vmem:[#allocation4 + $0xf8] sm:$0xff]
      %v627 = vld [vmem:[%s5] sm:$0x3]
      %v629 = vlaneseq
      %v630 = vshrl.u32 %v629, 7
      %v631 = vsub.s32 0, %v630
      %v632 = vrot.slane %v627, %v631
      %v633 = vlaneseq
      %v634 = vshrl.u32 %v633, 7
      %v635 = vsub.s32 1, %v634
      %v636 = vrot.slane %v627, %v635
      %v671 = vunpack.c.l.b16 %v595
      %v672 = vunpack.c.h.b16 %v595
      %v673 = vunpack.c.l.b16 %v596
      %v674 = vunpack.c.h.b16 %v596
      %v675 = vunpack.c.l.b16 %v597
      %v676 = vunpack.c.h.b16 %v597
      %v677 = vunpack.c.l.b16 %v598
      %v678 = vunpack.c.h.b16 %v598
      %v679 = vunpack.c.l.b16 %v599
      %v680 = vunpack.c.h.b16 %v599
      %v681 = vunpack.c.l.b16 %v600
      %v682 = vunpack.c.h.b16 %v600
      %v683 = vunpack.c.l.b16 %v601
      %v684 = vunpack.c.h.b16 %v601
      %v685 = vunpack.c.l.b16 %v602
      %v686 = vunpack.c.h.b16 %v602
      %v687 = vunpack.c.l.b16 %v603
      %v688 = vunpack.c.h.b16 %v603
      %v689 = vunpack.c.l.b16 %v604
      %v690 = vunpack.c.h.b16 %v604
      %v691 = vunpack.c.l.b16 %v605
      %v692 = vunpack.c.h.b16 %v605
      %v693 = vunpack.c.l.b16 %v606
      %v694 = vunpack.c.h.b16 %v606
      %v695 = vunpack.c.l.b16 %v607
      %v696 = vunpack.c.h.b16 %v607
      %v697 = vunpack.c.l.b16 %v608
      %v698 = vunpack.c.h.b16 %v608
      %v699 = vunpack.c.l.b16 %v609
      %v700 = vunpack.c.h.b16 %v609
      %v701 = vunpack.c.l.b16 %v610
      %v702 = vunpack.c.h.b16 %v610
      %v703 = vunpack.c.l.b16 %v611
      %v704 = vunpack.c.h.b16 %v611
      %v705 = vunpack.c.l.b16 %v612
      %v706 = vunpack.c.h.b16 %v612
      %v707 = vunpack.c.l.b16 %v613
      %v708 = vunpack.c.h.b16 %v613
      %v709 = vunpack.c.l.b16 %v614
      %v710 = vunpack.c.h.b16 %v614
      %v711 = vunpack.c.l.b16 %v615
      %v712 = vunpack.c.h.b16 %v615
      %v713 = vunpack.c.l.b16 %v616
      %v714 = vunpack.c.h.b16 %v616
      %v715 = vunpack.c.l.b16 %v617
      %v716 = vunpack.c.h.b16 %v617
      %v717 = vunpack.c.l.b16 %v618
      %v718 = vunpack.c.h.b16 %v618
      %v719 = vunpack.c.l.b16 %v619
      %v720 = vunpack.c.h.b16 %v619
      %v721 = vunpack.c.l.b16 %v620
      %v722 = vunpack.c.h.b16 %v620
      %v723 = vunpack.c.l.b16 %v621
      %v724 = vunpack.c.h.b16 %v621
      %v725 = vunpack.c.l.b16 %v622
      %v726 = vunpack.c.h.b16 %v622
      %v727 = vunpack.c.l.b16 %v623
      %v728 = vunpack.c.h.b16 %v623
      %v729 = vunpack.c.l.b16 %v624
      %v730 = vunpack.c.h.b16 %v624
      %v731 = vunpack.c.l.b16 %v625
      %v732 = vunpack.c.h.b16 %v625
      %v733 = vunpack.c.l.b16 %v626
      %v734 = vunpack.c.h.b16 %v626
      %v735 = vpack.c.b16 %v673, %v671
      %v736 = vpack.c.b16 %v674, %v672
      %v737 = vpack.c.b16 %v677, %v675
      %v738 = vpack.c.b16 %v678, %v676
      %v739 = vpack.c.b16 %v681, %v679
      %v740 = vpack.c.b16 %v682, %v680
      %v741 = vpack.c.b16 %v685, %v683
      %v742 = vpack.c.b16 %v686, %v684
      %v743 = vpack.c.b16 %v689, %v687
      %v744 = vpack.c.b16 %v690, %v688
      %v745 = vpack.c.b16 %v693, %v691
      %v746 = vpack.c.b16 %v694, %v692
      %v747 = vpack.c.b16 %v697, %v695
      %v748 = vpack.c.b16 %v698, %v696
      %v749 = vpack.c.b16 %v701, %v699
      %v750 = vpack.c.b16 %v702, %v700
      %v751 = vpack.c.b16 %v705, %v703
      %v752 = vpack.c.b16 %v706, %v704
      %v753 = vpack.c.b16 %v709, %v707
      %v754 = vpack.c.b16 %v710, %v708
      %v755 = vpack.c.b16 %v713, %v711
      %v756 = vpack.c.b16 %v714, %v712
      %v757 = vpack.c.b16 %v717, %v715
      %v758 = vpack.c.b16 %v718, %v716
      %v759 = vpack.c.b16 %v721, %v719
      %v760 = vpack.c.b16 %v722, %v720
      %v761 = vpack.c.b16 %v725, %v723
      %v762 = vpack.c.b16 %v726, %v724
      %v763 = vpack.c.b16 %v729, %v727
      %v764 = vpack.c.b16 %v730, %v728
      %v765 = vpack.c.b16 %v733, %v731
      %v766 = vpack.c.b16 %v734, %v732
      %799 = vmatprep.subr.bf16.mxu0 %v750
      %800 = vmatpush1.bf16.msra.mxu0 %v749
      %801 = vmatprep.subr.bf16.mxu0 %v748
      %802 = vmatpush1.bf16.msra.mxu0 %v747
      %803 = vmatprep.subr.bf16.mxu0 %v746
      %804 = vmatpush1.bf16.msra.mxu0 %v745
      %805 = vmatprep.subr.bf16.mxu0 %v744
      %806 = vmatpush1.bf16.msra.mxu0 %v743
      %807 = vmatprep.subr.bf16.mxu0 %v742
      %808 = vmatpush1.bf16.msra.mxu0 %v741
      %809 = vmatprep.subr.bf16.mxu0 %v740
      %810 = vmatpush1.bf16.msra.mxu0 %v739
      %811 = vmatprep.subr.bf16.mxu0 %v738
      %812 = vmatpush1.bf16.msra.mxu0 %v737
      %813 = vmatprep.subr.bf16.mxu0 %v736
      %814 = vmatpush1.bf16.msra.mxu0 %v735
      %815 = vmatprep.subr.bf16.mxu0 %v766
      %816 = vmatpush2.bf16.msra.mxu0 %v765
      %817 = vmatprep.subr.bf16.mxu0 %v764
      %818 = vmatpush2.bf16.msra.mxu0 %v763
      %819 = vmatprep.subr.bf16.mxu0 %v762
      %820 = vmatpush2.bf16.msra.mxu0 %v761
      %821 = vmatprep.subr.bf16.mxu0 %v760
      %822 = vmatpush2.bf16.msra.mxu0 %v759
      %823 = vmatprep.subr.bf16.mxu0 %v758
      %824 = vmatpush2.bf16.msra.mxu0 %v757
      %825 = vmatprep.subr.bf16.mxu0 %v756
      %826 = vmatpush2.bf16.msra.mxu0 %v755
      %827 = vmatprep.subr.bf16.mxu0 %v754
      %828 = vmatpush2.bf16.msra.mxu0 %v753
      %829 = vmatprep.subr.bf16.mxu0 %v752
      %830 = vmatpush2.bf16.msra.mxu0 %v751
      %831 = vmatprep.mubr.bf16.mxu0 %v594
      %832 = vmatmul.mubr.bf16.gmra.mxu0 %v593
      %v833 = vpop.f32.mrf.mxu0
      %v834 = vadd.f32 %v632, %v833
      %v835 = vpop.f32.mrf.mxu0
      %v836 = vadd.f32 %v636, %v835
      %v837 = vpop.f32.mrf.mxu0
      %v838 = vpop.f32.mrf.mxu0
      %839 = vdwg.mxu0
      %840 = vst [vmem:[#allocation7] sm:$0xff] %v834
      %841 = vst [vmem:[#allocation7 + $0x8] sm:$0xff] %v836
    $region37: #{tpu_custom_call.1} parent=1 // pred_fallthru
      _
    // Predicated region
    $region38: #{tpu_custom_call.1} parent=1 // pred_check
      _
    $region39: #{tpu_custom_call.1} parent=1 // pred_check_branch
      %843 = sbr.rel (0) target = $region41
    $region40: #{tpu_custom_call.1} parent=1 // pred_region
      %s845 = ssub.s32 256, 256
      %846 = vsyncadd [#allocation6], %s845
      %s848 = sshll.u32 [#allocation7], 4
      %s849 = int_to_ptr.vmem [resolvable:$true] %s848
      %851 = dma.vmem_to_hbm [thread:$0]  %s849, 256, %s6, [#allocation6]
    $region41: #{tpu_custom_call.1} parent=1 // pred_fallthru
      _
    // Predicated region
    $region42: #{tpu_custom_call.1} parent=1 // pred_check
      _
    $region43: #{tpu_custom_call.1} parent=1 // pred_check_branch
      %853 = sbr.rel (0) target = $region45
    $region44: #{tpu_custom_call.1} parent=1 // pred_region
      %854 = dma.done [#allocation6], 256
    $region45: #{tpu_custom_call.1} parent=1 // pred_fallthru
      _
    %855 = vsyncpa [#allocation5], 1
    %856 = vsyncpa [#allocation6], 1

</llo_original>
